<compile_context>
chip_gen: v6e
topology: v6e:2x2x1
jax: 0.10.0
libtpu: 0.0.40
codegen_flags: <defaults>
</compile_context>

<pallas_src>
import functools

import jax
import jax.numpy as jnp
from jax import lax
from jax.experimental import pallas as pl
from jax.experimental.pallas import tpu as pltpu


def _pbrnn_lstm_kernel(x_ref, wihT_ref, whhT_ref, b_ref,
                       h_out_ref, c_out_ref,
                       gx_sc, h_sc, c_sc, *, unroll):
    """One grid step = one T-tile of the flattened stream.

    x_ref    : (tile_T, D)   this tile of the flattened input stream
    wihT_ref : (D, 4H)       input->gates weights (transposed), resident
    whhT_ref : (H, 4H)       hidden->gates weights (transposed), resident
    b_ref    : (1, 4H)       b_ih + b_hh, resident
    h_out_ref, c_out_ref : (1, H) final hidden / cell state (written last step)
    gx_sc    : (tile_T, 4H)  scratch - per-tile input projections
    h_sc, c_sc : (1, H)      scratch - (h, c) carried across grid steps
    """
    t = pl.program_id(0)
    last = pl.num_programs(0) - 1
    H = h_sc.shape[1]
    tile_t = x_ref.shape[0]

    # (h, c) start at zero for the whole stream.
    @pl.when(t == 0)
    def _():
        h_sc[...] = jnp.zeros_like(h_sc)
        c_sc[...] = jnp.zeros_like(c_sc)

    # Hot matmul #1 (MXU): project this whole tile's inputs onto the 4 gates
    # in one shot; gate order along the last axis is [i | f | g | o].
    gx_sc[...] = (
        jnp.dot(x_ref[...], wihT_ref[...], preferred_element_type=jnp.float32)
        + b_ref[...]
    )

    # Hoist the recurrent weights once per tile; (h, c) live as fori_loop
    # carries (vregs) -- no per-step VMEM round trip.
    whhT = whhT_ref[...]

    def group(tb, carry):
        h, c = carry
        base = pl.multiple_of(tb * unroll, unroll)
        gx_blk = gx_sc[pl.ds(base, unroll), :]          # aligned (unroll, 4H) load
        for r in range(unroll):                          # static unroll
            # Hot matmul #2 (recurrent, serial): h_{t-1} @ W_hh^T
            gates = gx_blk[r:r + 1, :] + jnp.dot(
                h, whhT, preferred_element_type=jnp.float32)
            sig = jax.nn.sigmoid(gates)                  # one EUP pass, full vreg
            tnh = jnp.tanh(gates)                        # one EUP pass, full vreg
            i_g = sig[:, 0 * H:1 * H]
            f_g = sig[:, 1 * H:2 * H]
            g_g = tnh[:, 2 * H:3 * H]
            o_g = sig[:, 3 * H:4 * H]
            c = f_g * c + i_g * g_g
            h = o_g * jnp.tanh(c)
        return h, c

    h, c = lax.fori_loop(0, tile_t // unroll, group, (h_sc[...], c_sc[...]))

    # Write the carry back once per tile (not per step).
    h_sc[...] = h
    c_sc[...] = c

    @pl.when(t == last)
    def _():
        h_out_ref[...] = h_sc[...]
        c_out_ref[...] = c_sc[...]


def _pick_tiling(T, max_tile=512):
    """Pick (tile_T, unroll): unroll | tile_T | T, tile_T sublane-aligned."""
    unroll = next(u for u in (8, 4, 2, 1) if T % u == 0)
    tile = None
    for cand in range(8, min(T, max_tile) + 1, 8):       # multiples of 8
        if T % cand == 0:
            tile = cand
    if tile is None:
        tile = T                                          # full-extent block is legal
    return tile, unroll


def pbrnn_forward(X, w_ih, w_hh, b_ih, b_hh, *, max_tile=512):
    """X: (batch, seq, state_aug_dim).  Returns (h_n, c_n), each (1, 1, n_hid)."""
    n_batch, n_seq, n_dim = X.shape
    four_h = w_ih.shape[0]
    H = four_h // 4
    T = n_seq * n_batch
    tile_t, unroll = _pick_tiling(T, max_tile)

    # Glue: reproduce X.permute(1, 0, 2) then flatten seq-major.
    x_flat = jnp.transpose(X, (1, 0, 2)).reshape(T, n_dim).astype(jnp.float32)
    wihT = jnp.transpose(w_ih).astype(jnp.float32)            # (D, 4H)
    whhT = jnp.transpose(w_hh).astype(jnp.float32)            # (H, 4H)
    bias = (b_ih + b_hh).reshape(1, four_h).astype(jnp.float32)

    kernel = functools.partial(_pbrnn_lstm_kernel, unroll=unroll)
    h_n, c_n = pl.pallas_call(
        kernel,
        out_shape=(
            jax.ShapeDtypeStruct((1, H), jnp.float32),
            jax.ShapeDtypeStruct((1, H), jnp.float32),
        ),
        grid=(T // tile_t,),
        in_specs=[
            pl.BlockSpec((tile_t, n_dim), lambda t: (t, 0)),   # streamed x tiles
            pl.BlockSpec((n_dim, four_h), lambda t: (0, 0)),   # resident weights
            pl.BlockSpec((H, four_h), lambda t: (0, 0)),
            pl.BlockSpec((1, four_h), lambda t: (0, 0)),
        ],
        out_specs=(
            pl.BlockSpec((1, H), lambda t: (0, 0)),
            pl.BlockSpec((1, H), lambda t: (0, 0)),
        ),
        scratch_shapes=[
            pltpu.VMEM((tile_t, four_h), jnp.float32),   # per-tile gate projections
            pltpu.VMEM((1, H), jnp.float32),             # h carried across tiles
            pltpu.VMEM((1, H), jnp.float32),             # c carried across tiles
        ],
        compiler_params=pltpu.CompilerParams(
            dimension_semantics=("arbitrary",),          # serial recurrence over T
            vmem_limit_bytes=32 * 1024 * 1024,
        ),
    )(x_flat, wihT, whhT, bias)

    # Match torch.nn.LSTM hidden-state shape: (num_layers=1, batch=1, H).
    return h_n.reshape(1, 1, H), c_n.reshape(1, 1, H)


def _lstm_reference(X, w_ih, w_hh, b_ih, b_hh):
    """Pure-JAX reference replicating torch.nn.LSTM over the same stream."""
    n_batch, n_seq, n_dim = X.shape
    H = w_hh.shape[1]
    x_flat = jnp.transpose(X, (1, 0, 2)).reshape(n_seq * n_batch, n_dim)

    def step(carry, x_t):
        h, c = carry
        gates = x_t @ w_ih.T + b_ih + h @ w_hh.T + b_hh
        i_g, f_g, g_g, o_g = jnp.split(gates, 4)
        c = jax.nn.sigmoid(f_g) * c + jax.nn.sigmoid(i_g) * jnp.tanh(g_g)
        h = jax.nn.sigmoid(o_g) * jnp.tanh(c)
        return (h, c), None

    (h, c), _ = lax.scan(step, (jnp.zeros(H), jnp.zeros(H)), x_flat)
    return h.reshape(1, 1, H), c.reshape(1, 1, H)


if __name__ == "__main__":
    # Small, forward-consistent shapes.
    state_dim, pb_dim, n_hid = 24, 8, 32
    state_aug_dim = state_dim + pb_dim            # LSTM input size
    n_batch, n_seq = 2, 8

    key = jax.random.PRNGKey(0)
    k_x, k_x2, k1, k2, k3, k4 = jax.random.split(key, 6)

    # Deterministic parameter init, same family as torch.nn.LSTM
    # (uniform in [-1/sqrt(H), 1/sqrt(H)]).
    s = 1.0 / jnp.sqrt(jnp.float32(n_hid))
    w_ih = jax.random.uniform(k1, (4 * n_hid, state_aug_dim), jnp.float32, -s, s)
    w_hh = jax.random.uniform(k2, (4 * n_hid, n_hid), jnp.float32, -s, s)
    b_ih = jax.random.uniform(k3, (4 * n_hid,), jnp.float32, -s, s)
    b_hh = jax.random.uniform(k4, (4 * n_hid,), jnp.float32, -s, s)

    # Input X: (batch, seq, state_dim + pb_dim) — what forward() expects.
    X = jax.random.normal(k_x, (n_batch, n_seq, state_aug_dim), jnp.float32)

    h_n, c_n = pbrnn_forward(X, w_ih, w_hh, b_ih, b_hh)
    jax.block_until_ready((h_n, c_n))

    h_ref, c_ref = _lstm_reference(X, w_ih, w_hh, b_ih, b_hh)
    assert jnp.allclose(h_n, h_ref, atol=1e-4, rtol=1e-4)
    assert jnp.allclose(c_n, c_ref, atol=1e-4, rtol=1e-4)

    # Second check: force multiple T-tiles (grid > 1) to exercise the
    # persistent-scratch (h, c) carry across grid steps.
    X2 = jax.random.normal(k_x2, (n_batch, 16, state_aug_dim), jnp.float32)
    h_n2, c_n2 = pbrnn_forward(X2, w_ih, w_hh, b_ih, b_hh, max_tile=8)
    jax.block_until_ready((h_n2, c_n2))
    h_ref2, c_ref2 = _lstm_reference(X2, w_ih, w_hh, b_ih, b_hh)
    assert jnp.allclose(h_n2, h_ref2, atol=1e-4, rtol=1e-4)
    assert jnp.allclose(c_n2, c_ref2, atol=1e-4, rtol=1e-4)

    # TODO(synk): forward() in the PyTorch module returns None (discards hc);
    # the kernel returns the final (h_n, c_n) since that is the only state the
    # forward pass actually computes.
    print("KERNEL_OK")
</pallas_src>

<mosaic_0001>
module attributes {stable_mosaic.version = 11 : i64} {
  func.func @_pbrnn_lstm_kernel(%arg0: i32, %arg1: memref<16x32xf32, #tpu.memory_space<vmem>>, %arg2: memref<32x128xf32, #tpu.memory_space<vmem>>, %arg3: memref<32x128xf32, #tpu.memory_space<vmem>>, %arg4: memref<1x128xf32, #tpu.memory_space<vmem>>, %arg5: memref<1x32xf32, #tpu.memory_space<vmem>>, %arg6: memref<1x32xf32, #tpu.memory_space<vmem>>, %arg7: memref<16x128xf32, #tpu.memory_space<vmem>>, %arg8: memref<1x32xf32, #tpu.memory_space<vmem>>, %arg9: memref<1x32xf32, #tpu.memory_space<vmem>>) attributes {dimension_semantics = [#tpu.dimension_semantics<arbitrary>], iteration_bounds = array<i64: 1>, scalar_prefetch = 0 : i64, scratch_operands = 3 : i64, tpu.core_type = #tpu.core_type<tc>, window_params = [{transform_indices = @transform_0, window_bounds = array<i64: 16, 32>}, {pipeline_mode = #tpu.pipeline_mode<synchronous>, transform_indices = @transform_1, window_bounds = array<i64: 32, 128>}, {pipeline_mode = #tpu.pipeline_mode<synchronous>, transform_indices = @transform_2, window_bounds = array<i64: 32, 128>}, {pipeline_mode = #tpu.pipeline_mode<synchronous>, transform_indices = @transform_3, window_bounds = array<i64: 1, 128>}, {pipeline_mode = #tpu.pipeline_mode<synchronous>, transform_indices = @transform_4, window_bounds = array<i64: 1, 32>}, {pipeline_mode = #tpu.pipeline_mode<synchronous>, transform_indices = @transform_5, window_bounds = array<i64: 1, 32>}]} {
    %c0_i32 = arith.constant 0 : i32
    %0 = arith.cmpi eq, %arg0, %c0_i32 : i32
    %1 = arith.extui %0 : i1 to i32
    %c0_i32_0 = arith.constant 0 : i32
    %2 = arith.cmpi ne, %1, %c0_i32_0 : i32
    scf.if %2 {
      %cst_22 = arith.constant 0.000000e+00 : f32
      %20 = vector.broadcast %cst_22 : f32 to vector<1x32xf32>
      %c0_23 = arith.constant 0 : index
      %c0_24 = arith.constant 0 : index
      %21 = vector.load %arg8[%c0_23, %c0_24] : memref<1x32xf32, #tpu.memory_space<vmem>>, vector<1x32xf32>
      tpu.vector_store %arg8[%c0_23, %c0_24], %20 {strides = array<i32>} : memref<1x32xf32, #tpu.memory_space<vmem>>, vector<1x32xf32>,
      %cst_25 = arith.constant 0.000000e+00 : f32
      %22 = vector.broadcast %cst_25 : f32 to vector<1x32xf32>
      %c0_26 = arith.constant 0 : index
      %c0_27 = arith.constant 0 : index
      %23 = vector.load %arg9[%c0_26, %c0_27] : memref<1x32xf32, #tpu.memory_space<vmem>>, vector<1x32xf32>
      tpu.vector_store %arg9[%c0_26, %c0_27], %22 {strides = array<i32>} : memref<1x32xf32, #tpu.memory_space<vmem>>, vector<1x32xf32>,
    } else {
    }
    %c0 = arith.constant 0 : index
    %c0_1 = arith.constant 0 : index
    %3 = vector.load %arg1[%c0, %c0_1] : memref<16x32xf32, #tpu.memory_space<vmem>>, vector<16x32xf32>
    %c0_2 = arith.constant 0 : index
    %c0_3 = arith.constant 0 : index
    %4 = vector.load %arg2[%c0_2, %c0_3] : memref<32x128xf32, #tpu.memory_space<vmem>>, vector<32x128xf32>
    %cst = arith.constant dense<0.000000e+00> : vector<16x128xf32>
    %5 = tpu.matmul %3, %4, %cst {dimension_numbers = #tpu.dot_dimension_numbers<[1], [0], [0], [1], [0, 0, 1, 1], [], []>} : vector<16x32xf32>, vector<32x128xf32>, vector<16x128xf32> -> vector<16x128xf32>
    %c0_4 = arith.constant 0 : index
    %c0_5 = arith.constant 0 : index
    %6 = vector.load %arg4[%c0_4, %c0_5] : memref<1x128xf32, #tpu.memory_space<vmem>>, vector<1x128xf32>
    %7 = vector.broadcast %6 : vector<1x128xf32> to vector<16x128xf32>
    %8 = arith.addf %5, %7 : vector<16x128xf32>
    %c0_6 = arith.constant 0 : index
    %c0_7 = arith.constant 0 : index
    %9 = vector.load %arg7[%c0_6, %c0_7] : memref<16x128xf32, #tpu.memory_space<vmem>>, vector<16x128xf32>
    tpu.vector_store %arg7[%c0_6, %c0_7], %8 {strides = array<i32>} : memref<16x128xf32, #tpu.memory_space<vmem>>, vector<16x128xf32>,
    %c0_8 = arith.constant 0 : index
    %c0_9 = arith.constant 0 : index
    %10 = vector.load %arg3[%c0_8, %c0_9] : memref<32x128xf32, #tpu.memory_space<vmem>>, vector<32x128xf32>
    %c0_10 = arith.constant 0 : index
    %c0_11 = arith.constant 0 : index
    %11 = vector.load %arg8[%c0_10, %c0_11] : memref<1x32xf32, #tpu.memory_space<vmem>>, vector<1x32xf32>
    %c0_12 = arith.constant 0 : index
    %c0_13 = arith.constant 0 : index
    %12 = vector.load %arg9[%c0_12, %c0_13] : memref<1x32xf32, #tpu.memory_space<vmem>>, vector<1x32xf32>
    %c0_i32_14 = arith.constant 0 : i32
    %c2_i32 = arith.constant 2 : i32
    %13 = arith.addi %c0_i32_14, %c2_i32 : i32
    %c1_i32 = arith.constant 1 : i32
    %14:2 = scf.for %arg10 = %c0_i32_14 to %13 step %c1_i32 iter_args(%arg11 = %11, %arg12 = %12) -> (vector<1x32xf32>, vector<1x32xf32>)  : i32 {
      %c8_i32 = arith.constant 8 : i32
      %20 = arith.muli %arg10, %c8_i32 : i32
      %21 = tpu.assume_multiple %20, 8 : i32
      %22 = arith.index_cast %21 : i32 to index
      %c0_22 = arith.constant 0 : index
      %23 = vector.load %arg7[%22, %c0_22] : memref<16x128xf32, #tpu.memory_space<vmem>>, vector<8x128xf32>
      %24 = vector.extract_strided_slice %23 {offsets = [0, 0], sizes = [1, 128], strides = [1, 1]} : vector<8x128xf32> to vector<1x128xf32>
      %cst_23 = arith.constant dense<0.000000e+00> : vector<1x128xf32>
      %25 = tpu.matmul %arg11, %10, %cst_23 {dimension_numbers = #tpu.dot_dimension_numbers<[1], [0], [0], [1], [0, 0, 1, 1], [], []>} : vector<1x32xf32>, vector<32x128xf32>, vector<1x128xf32> -> vector<1x128xf32>
      %26 = arith.addf %24, %25 : vector<1x128xf32>
      %27 = arith.negf %26 : vector<1x128xf32>
      %28 = math.exp %27 : vector<1x128xf32>
      %cst_24 = arith.constant 1.000000e+00 : f32
      %29 = vector.broadcast %cst_24 : f32 to vector<1x128xf32>
      %30 = arith.addf %29, %28 : vector<1x128xf32>
      %31 = arith.divf %29, %30 : vector<1x128xf32>
      %32 = math.tanh %26 : vector<1x128xf32>
      %33 = vector.extract_strided_slice %31 {offsets = [0, 0], sizes = [1, 32], strides = [1, 1]} : vector<1x128xf32> to vector<1x32xf32>
      %34 = vector.extract_strided_slice %31 {offsets = [0, 32], sizes = [1, 32], strides = [1, 1]} : vector<1x128xf32> to vector<1x32xf32>
      %35 = vector.extract_strided_slice %32 {offsets = [0, 64], sizes = [1, 32], strides = [1, 1]} : vector<1x128xf32> to vector<1x32xf32>
      %36 = vector.extract_strided_slice %31 {offsets = [0, 96], sizes = [1, 32], strides = [1, 1]} : vector<1x128xf32> to vector<1x32xf32>
      %37 = arith.mulf %34, %arg12 : vector<1x32xf32>
      %38 = arith.mulf %33, %35 : vector<1x32xf32>
      %39 = arith.addf %37, %38 : vector<1x32xf32>
      %40 = math.tanh %39 : vector<1x32xf32>
      %41 = arith.mulf %36, %40 : vector<1x32xf32>
      %42 = vector.extract_strided_slice %23 {offsets = [1, 0], sizes = [1, 128], strides = [1, 1]} : vector<8x128xf32> to vector<1x128xf32>
      %cst_25 = arith.constant dense<0.000000e+00> : vector<1x128xf32>
      %43 = tpu.matmul %41, %10, %cst_25 {dimension_numbers = #tpu.dot_dimension_numbers<[1], [0], [0], [1], [0, 0, 1, 1], [], []>} : vector<1x32xf32>, vector<32x128xf32>, vector<1x128xf32> -> vector<1x128xf32>
      %44 = arith.addf %42, %43 : vector<1x128xf32>
      %45 = arith.negf %44 : vector<1x128xf32>
      %46 = math.exp %45 : vector<1x128xf32>
      %cst_26 = arith.constant 1.000000e+00 : f32
      %47 = vector.broadcast %cst_26 : f32 to vector<1x128xf32>
      %48 = arith.addf %47, %46 : vector<1x128xf32>
      %49 = arith.divf %47, %48 : vector<1x128xf32>
      %50 = math.tanh %44 : vector<1x128xf32>
      %51 = vector.extract_strided_slice %49 {offsets = [0, 0], sizes = [1, 32], strides = [1, 1]} : vector<1x128xf32> to vector<1x32xf32>
      %52 = vector.extract_strided_slice %49 {offsets = [0, 32], sizes = [1, 32], strides = [1, 1]} : vector<1x128xf32> to vector<1x32xf32>
      %53 = vector.extract_strided_slice %50 {offsets = [0, 64], sizes = [1, 32], strides = [1, 1]} : vector<1x128xf32> to vector<1x32xf32>
      %54 = vector.extract_strided_slice %49 {offsets = [0, 96], sizes = [1, 32], strides = [1, 1]} : vector<1x128xf32> to vector<1x32xf32>
      %55 = arith.mulf %52, %39 : vector<1x32xf32>
      %56 = arith.mulf %51, %53 : vector<1x32xf32>
      %57 = arith.addf %55, %56 : vector<1x32xf32>
      %58 = math.tanh %57 : vector<1x32xf32>
      %59 = arith.mulf %54, %58 : vector<1x32xf32>
      %60 = vector.extract_strided_slice %23 {offsets = [2, 0], sizes = [1, 128], strides = [1, 1]} : vector<8x128xf32> to vector<1x128xf32>
      %cst_27 = arith.constant dense<0.000000e+00> : vector<1x128xf32>
      %61 = tpu.matmul %59, %10, %cst_27 {dimension_numbers = #tpu.dot_dimension_numbers<[1], [0], [0], [1], [0, 0, 1, 1], [], []>} : vector<1x32xf32>, vector<32x128xf32>, vector<1x128xf32> -> vector<1x128xf32>
      %62 = arith.addf %60, %61 : vector<1x128xf32>
      %63 = arith.negf %62 : vector<1x128xf32>
      %64 = math.exp %63 : vector<1x128xf32>
      %cst_28 = arith.constant 1.000000e+00 : f32
      %65 = vector.broadcast %cst_28 : f32 to vector<1x128xf32>
      %66 = arith.addf %65, %64 : vector<1x128xf32>
      %67 = arith.divf %65, %66 : vector<1x128xf32>
      %68 = math.tanh %62 : vector<1x128xf32>
      %69 = vector.extract_strided_slice %67 {offsets = [0, 0], sizes = [1, 32], strides = [1, 1]} : vector<1x128xf32> to vector<1x32xf32>
      %70 = vector.extract_strided_slice %67 {offsets = [0, 32], sizes = [1, 32], strides = [1, 1]} : vector<1x128xf32> to vector<1x32xf32>
      %71 = vector.extract_strided_slice %68 {offsets = [0, 64], sizes = [1, 32], strides = [1, 1]} : vector<1x128xf32> to vector<1x32xf32>
      %72 = vector.extract_strided_slice %67 {offsets = [0, 96], sizes = [1, 32], strides = [1, 1]} : vector<1x128xf32> to vector<1x32xf32>
      %73 = arith.mulf %70, %57 : vector<1x32xf32>
      %74 = arith.mulf %69, %71 : vector<1x32xf32>
      %75 = arith.addf %73, %74 : vector<1x32xf32>
      %76 = math.tanh %75 : vector<1x32xf32>
      %77 = arith.mulf %72, %76 : vector<1x32xf32>
      %78 = vector.extract_strided_slice %23 {offsets = [3, 0], sizes = [1, 128], strides = [1, 1]} : vector<8x128xf32> to vector<1x128xf32>
      %cst_29 = arith.constant dense<0.000000e+00> : vector<1x128xf32>
      %79 = tpu.matmul %77, %10, %cst_29 {dimension_numbers = #tpu.dot_dimension_numbers<[1], [0], [0], [1], [0, 0, 1, 1], [], []>} : vector<1x32xf32>, vector<32x128xf32>, vector<1x128xf32> -> vector<1x128xf32>
      %80 = arith.addf %78, %79 : vector<1x128xf32>
      %81 = arith.negf %80 : vector<1x128xf32>
      %82 = math.exp %81 : vector<1x128xf32>
      %cst_30 = arith.constant 1.000000e+00 : f32
      %83 = vector.broadcast %cst_30 : f32 to vector<1x128xf32>
      %84 = arith.addf %83, %82 : vector<1x128xf32>
      %85 = arith.divf %83, %84 : vector<1x128xf32>
      %86 = math.tanh %80 : vector<1x128xf32>
      %87 = vector.extract_strided_slice %85 {offsets = [0, 0], sizes = [1, 32], strides = [1, 1]} : vector<1x128xf32> to vector<1x32xf32>
      %88 = vector.extract_strided_slice %85 {offsets = [0, 32], sizes = [1, 32], strides = [1, 1]} : vector<1x128xf32> to vector<1x32xf32>
      %89 = vector.extract_strided_slice %86 {offsets = [0, 64], sizes = [1, 32], strides = [1, 1]} : vector<1x128xf32> to vector<1x32xf32>
      %90 = vector.extract_strided_slice %85 {offsets = [0, 96], sizes = [1, 32], strides = [1, 1]} : vector<1x128xf32> to vector<1x32xf32>
      %91 = arith.mulf %88, %75 : vector<1x32xf32>
      %92 = arith.mulf %87, %89 : vector<1x32xf32>
      %93 = arith.addf %91, %92 : vector<1x32xf32>
      %94 = math.tanh %93 : vector<1x32xf32>
      %95 = arith.mulf %90, %94 : vector<1x32xf32>
      %96 = vector.extract_strided_slice %23 {offsets = [4, 0], sizes = [1, 128], strides = [1, 1]} : vector<8x128xf32> to vector<1x128xf32>
      %cst_31 = arith.constant dense<0.000000e+00> : vector<1x128xf32>
      %97 = tpu.matmul %95, %10, %cst_31 {dimension_numbers = #tpu.dot_dimension_numbers<[1], [0], [0], [1], [0, 0, 1, 1], [], []>} : vector<1x32xf32>, vector<32x128xf32>, vector<1x128xf32> -> vector<1x128xf32>
      %98 = arith.addf %96, %97 : vector<1x128xf32>
      %99 = arith.negf %98 : vector<1x128xf32>
      %100 = math.exp %99 : vector<1x128xf32>
      %cst_32 = arith.constant 1.000000e+00 : f32
      %101 = vector.broadcast %cst_32 : f32 to vector<1x128xf32>
      %102 = arith.addf %101, %100 : vector<1x128xf32>
      %103 = arith.divf %101, %102 : vector<1x128xf32>
      %104 = math.tanh %98 : vector<1x128xf32>
      %105 = vector.extract_strided_slice %103 {offsets = [0, 0], sizes = [1, 32], strides = [1, 1]} : vector<1x128xf32> to vector<1x32xf32>
      %106 = vector.extract_strided_slice %103 {offsets = [0, 32], sizes = [1, 32], strides = [1, 1]} : vector<1x128xf32> to vector<1x32xf32>
      %107 = vector.extract_strided_slice %104 {offsets = [0, 64], sizes = [1, 32], strides = [1, 1]} : vector<1x128xf32> to vector<1x32xf32>
      %108 = vector.extract_strided_slice %103 {offsets = [0, 96], sizes = [1, 32], strides = [1, 1]} : vector<1x128xf32> to vector<1x32xf32>
      %109 = arith.mulf %106, %93 : vector<1x32xf32>
      %110 = arith.mulf %105, %107 : vector<1x32xf32>
      %111 = arith.addf %109, %110 : vector<1x32xf32>
      %112 = math.tanh %111 : vector<1x32xf32>
      %113 = arith.mulf %108, %112 : vector<1x32xf32>
      %114 = vector.extract_strided_slice %23 {offsets = [5, 0], sizes = [1, 128], strides = [1, 1]} : vector<8x128xf32> to vector<1x128xf32>
      %cst_33 = arith.constant dense<0.000000e+00> : vector<1x128xf32>
      %115 = tpu.matmul %113, %10, %cst_33 {dimension_numbers = #tpu.dot_dimension_numbers<[1], [0], [0], [1], [0, 0, 1, 1], [], []>} : vector<1x32xf32>, vector<32x128xf32>, vector<1x128xf32> -> vector<1x128xf32>
      %116 = arith.addf %114, %115 : vector<1x128xf32>
      %117 = arith.negf %116 : vector<1x128xf32>
      %118 = math.exp %117 : vector<1x128xf32>
      %cst_34 = arith.constant 1.000000e+00 : f32
      %119 = vector.broadcast %cst_34 : f32 to vector<1x128xf32>
      %120 = arith.addf %119, %118 : vector<1x128xf32>
      %121 = arith.divf %119, %120 : vector<1x128xf32>
      %122 = math.tanh %116 : vector<1x128xf32>
      %123 = vector.extract_strided_slice %121 {offsets = [0, 0], sizes = [1, 32], strides = [1, 1]} : vector<1x128xf32> to vector<1x32xf32>
      %124 = vector.extract_strided_slice %121 {offsets = [0, 32], sizes = [1, 32], strides = [1, 1]} : vector<1x128xf32> to vector<1x32xf32>
      %125 = vector.extract_strided_slice %122 {offsets = [0, 64], sizes = [1, 32], strides = [1, 1]} : vector<1x128xf32> to vector<1x32xf32>
      %126 = vector.extract_strided_slice %121 {offsets = [0, 96], sizes = [1, 32], strides = [1, 1]} : vector<1x128xf32> to vector<1x32xf32>
      %127 = arith.mulf %124, %111 : vector<1x32xf32>
      %128 = arith.mulf %123, %125 : vector<1x32xf32>
      %129 = arith.addf %127, %128 : vector<1x32xf32>
      %130 = math.tanh %129 : vector<1x32xf32>
      %131 = arith.mulf %126, %130 : vector<1x32xf32>
      %132 = vector.extract_strided_slice %23 {offsets = [6, 0], sizes = [1, 128], strides = [1, 1]} : vector<8x128xf32> to vector<1x128xf32>
      %cst_35 = arith.constant dense<0.000000e+00> : vector<1x128xf32>
      %133 = tpu.matmul %131, %10, %cst_35 {dimension_numbers = #tpu.dot_dimension_numbers<[1], [0], [0], [1], [0, 0, 1, 1], [], []>} : vector<1x32xf32>, vector<32x128xf32>, vector<1x128xf32> -> vector<1x128xf32>
      %134 = arith.addf %132, %133 : vector<1x128xf32>
      %135 = arith.negf %134 : vector<1x128xf32>
      %136 = math.exp %135 : vector<1x128xf32>
      %cst_36 = arith.constant 1.000000e+00 : f32
      %137 = vector.broadcast %cst_36 : f32 to vector<1x128xf32>
      %138 = arith.addf %137, %136 : vector<1x128xf32>
      %139 = arith.divf %137, %138 : vector<1x128xf32>
      %140 = math.tanh %134 : vector<1x128xf32>
      %141 = vector.extract_strided_slice %139 {offsets = [0, 0], sizes = [1, 32], strides = [1, 1]} : vector<1x128xf32> to vector<1x32xf32>
      %142 = vector.extract_strided_slice %139 {offsets = [0, 32], sizes = [1, 32], strides = [1, 1]} : vector<1x128xf32> to vector<1x32xf32>
      %143 = vector.extract_strided_slice %140 {offsets = [0, 64], sizes = [1, 32], strides = [1, 1]} : vector<1x128xf32> to vector<1x32xf32>
      %144 = vector.extract_strided_slice %139 {offsets = [0, 96], sizes = [1, 32], strides = [1, 1]} : vector<1x128xf32> to vector<1x32xf32>
      %145 = arith.mulf %142, %129 : vector<1x32xf32>
      %146 = arith.mulf %141, %143 : vector<1x32xf32>
      %147 = arith.addf %145, %146 : vector<1x32xf32>
      %148 = math.tanh %147 : vector<1x32xf32>
      %149 = arith.mulf %144, %148 : vector<1x32xf32>
      %150 = vector.extract_strided_slice %23 {offsets = [7, 0], sizes = [1, 128], strides = [1, 1]} : vector<8x128xf32> to vector<1x128xf32>
      %cst_37 = arith.constant dense<0.000000e+00> : vector<1x128xf32>
      %151 = tpu.matmul %149, %10, %cst_37 {dimension_numbers = #tpu.dot_dimension_numbers<[1], [0], [0], [1], [0, 0, 1, 1], [], []>} : vector<1x32xf32>, vector<32x128xf32>, vector<1x128xf32> -> vector<1x128xf32>
      %152 = arith.addf %150, %151 : vector<1x128xf32>
      %153 = arith.negf %152 : vector<1x128xf32>
      %154 = math.exp %153 : vector<1x128xf32>
      %cst_38 = arith.constant 1.000000e+00 : f32
      %155 = vector.broadcast %cst_38 : f32 to vector<1x128xf32>
      %156 = arith.addf %155, %154 : vector<1x128xf32>
      %157 = arith.divf %155, %156 : vector<1x128xf32>
      %158 = math.tanh %152 : vector<1x128xf32>
      %159 = vector.extract_strided_slice %157 {offsets = [0, 0], sizes = [1, 32], strides = [1, 1]} : vector<1x128xf32> to vector<1x32xf32>
      %160 = vector.extract_strided_slice %157 {offsets = [0, 32], sizes = [1, 32], strides = [1, 1]} : vector<1x128xf32> to vector<1x32xf32>
      %161 = vector.extract_strided_slice %158 {offsets = [0, 64], sizes = [1, 32], strides = [1, 1]} : vector<1x128xf32> to vector<1x32xf32>
      %162 = vector.extract_strided_slice %157 {offsets = [0, 96], sizes = [1, 32], strides = [1, 1]} : vector<1x128xf32> to vector<1x32xf32>
      %163 = arith.mulf %160, %147 : vector<1x32xf32>
      %164 = arith.mulf %159, %161 : vector<1x32xf32>
      %165 = arith.addf %163, %164 : vector<1x32xf32>
      %166 = math.tanh %165 : vector<1x32xf32>
      %167 = arith.mulf %162, %166 : vector<1x32xf32>
      scf.yield %167, %165 : vector<1x32xf32>, vector<1x32xf32>
    }
    %c2_i32_15 = arith.constant 2 : i32
    %c0_16 = arith.constant 0 : index
    %c0_17 = arith.constant 0 : index
    %15 = vector.load %arg8[%c0_16, %c0_17] : memref<1x32xf32, #tpu.memory_space<vmem>>, vector<1x32xf32>
    tpu.vector_store %arg8[%c0_16, %c0_17], %14#0 {strides = array<i32>} : memref<1x32xf32, #tpu.memory_space<vmem>>, vector<1x32xf32>,
    %c0_18 = arith.constant 0 : index
    %c0_19 = arith.constant 0 : index
    %16 = vector.load %arg9[%c0_18, %c0_19] : memref<1x32xf32, #tpu.memory_space<vmem>>, vector<1x32xf32>
    tpu.vector_store %arg9[%c0_18, %c0_19], %14#1 {strides = array<i32>} : memref<1x32xf32, #tpu.memory_space<vmem>>, vector<1x32xf32>,
    %c0_i32_20 = arith.constant 0 : i32
    %17 = arith.cmpi eq, %arg0, %c0_i32_20 : i32
    %18 = arith.extui %17 : i1 to i32
    %c0_i32_21 = arith.constant 0 : i32
    %19 = arith.cmpi ne, %18, %c0_i32_21 : i32
    scf.if %19 {
      %c0_22 = arith.constant 0 : index
      %c0_23 = arith.constant 0 : index
      %20 = vector.load %arg8[%c0_22, %c0_23] : memref<1x32xf32, #tpu.memory_space<vmem>>, vector<1x32xf32>
      %c0_24 = arith.constant 0 : index
      %c0_25 = arith.constant 0 : index
      %21 = vector.load %arg5[%c0_24, %c0_25] : memref<1x32xf32, #tpu.memory_space<vmem>>, vector<1x32xf32>
      tpu.vector_store %arg5[%c0_24, %c0_25], %20 {strides = array<i32>} : memref<1x32xf32, #tpu.memory_space<vmem>>, vector<1x32xf32>,
      %c0_26 = arith.constant 0 : index
      %c0_27 = arith.constant 0 : index
      %22 = vector.load %arg9[%c0_26, %c0_27] : memref<1x32xf32, #tpu.memory_space<vmem>>, vector<1x32xf32>
      %c0_28 = arith.constant 0 : index
      %c0_29 = arith.constant 0 : index
      %23 = vector.load %arg6[%c0_28, %c0_29] : memref<1x32xf32, #tpu.memory_space<vmem>>, vector<1x32xf32>
      tpu.vector_store %arg6[%c0_28, %c0_29], %22 {strides = array<i32>} : memref<1x32xf32, #tpu.memory_space<vmem>>, vector<1x32xf32>,
    } else {
    }
    return
  }
  func.func @transform_0(%arg0: i32) -> (i32, i32) {
    %c0_i32 = arith.constant 0 : i32
    %c0_i32_0 = arith.constant 0 : i32
    return %arg0, %c0_i32 : i32, i32
  }
  func.func @transform_1(%arg0: i32) -> (i32, i32) {
    %c0_i32 = arith.constant 0 : i32
    %c0_i32_0 = arith.constant 0 : i32
    %c0_i32_1 = arith.constant 0 : i32
    return %c0_i32, %c0_i32_0 : i32, i32
  }
  func.func @transform_2(%arg0: i32) -> (i32, i32) {
    %c0_i32 = arith.constant 0 : i32
    %c0_i32_0 = arith.constant 0 : i32
    %c0_i32_1 = arith.constant 0 : i32
    return %c0_i32, %c0_i32_0 : i32, i32
  }
  func.func @transform_3(%arg0: i32) -> (i32, i32) {
    %c0_i32 = arith.constant 0 : i32
    %c0_i32_0 = arith.constant 0 : i32
    %c0_i32_1 = arith.constant 0 : i32
    return %c0_i32, %c0_i32_0 : i32, i32
  }
  func.func @transform_4(%arg0: i32) -> (i32, i32) {
    %c0_i32 = arith.constant 0 : i32
    %c0_i32_0 = arith.constant 0 : i32
    %c0_i32_1 = arith.constant 0 : i32
    return %c0_i32, %c0_i32_0 : i32, i32
  }
  func.func @transform_5(%arg0: i32) -> (i32, i32) {
    %c0_i32 = arith.constant 0 : i32
    %c0_i32_0 = arith.constant 0 : i32
    %c0_i32_1 = arith.constant 0 : i32
    return %c0_i32, %c0_i32_0 : i32, i32
  }
}

</mosaic_0001>

<llo_original>
// kernel: tpu_custom_call.1
$region0: #{tpu_custom_call.1}
  #allocation0 [shape = 'u32[]', space=smem, size = 0x4, offset = 0x4, fixed_abs, tag = 'smem constant byte address 0x4 - core index']
  #allocation1 [shape = 'u32[144,128]{1,0:T(1,128)}', space=vmem, size = 0x12000, scoped, tag = 'internal scratch']
  #allocation2 [shape = 'f32[16,128]{1,0:T(8,128)}', space=vmem, size = 0x2000, scoped, tag = 'scratch operand']
  #allocation3 [shape = 'f32[1,32]{1,0:T(1,128)}', space=vmem, size = 0x200, scoped, tag = 'scratch operand']
  #allocation4 [shape = 'f32[1,32]{1,0:T(1,128)}', space=vmem, size = 0x200, scoped, tag = 'scratch operand']
  %s0 = inlined_call_operand.hbm [shape: f32[16,32], index: 0, kind: input, shape index: {}]
  %s1 = inlined_call_operand.hbm [shape: f32[32,128], index: 1, kind: input, shape index: {}]
  %s2 = inlined_call_operand.hbm [shape: f32[32,128], index: 2, kind: input, shape index: {}]
  %s3 = inlined_call_operand.vmem [shape: f32[1,128], index: 3, kind: input, shape index: {}]
  %s4 = inlined_call_operand.hbm [shape: f32[1,32], index: 4, kind: output, shape index: {0}]
  %s5 = inlined_call_operand.hbm [shape: f32[1,32], index: 5, kind: output, shape index: {1}]
  %6 = xla_tuple %s4, %s5
  %s7 = sld [smem:[#allocation0]]
  $region61: #{tpu_custom_call.1} parent=0
    _
  %s9 = ssub.s32 1, %s7
  %s10 = scalar_select 0, %s9, %s7
  $region1: #{tpu_custom_call.1} parent=0
    #allocation5 [shape = 'u8[8192]{0}', space=vmem, size = 0x2000, scoped, tag = 'input window, operand 0, single buffered']
    #allocation6 [shape = 's32[1]{0}', space=sflag, size = 0x4, scoped, tag = 'scoped memory for tpu_custom_call.1']
    #allocation7 [shape = 's32[1]{0}', space=sflag, size = 0x4, scoped, tag = 'scoped memory for tpu_custom_call.1']
    #allocation8 [shape = 'u8[16384]{0}', space=vmem, size = 0x4000, scoped, tag = 'input window, operand 1, single buffered']
    #allocation9 [shape = 's32[1]{0}', space=sflag, size = 0x4, scoped, tag = 'scoped memory for tpu_custom_call.1']
    #allocation10 [shape = 'u8[16384]{0}', space=vmem, size = 0x4000, scoped, tag = 'input window, operand 2, single buffered']
    #allocation11 [shape = 'u8[512]{0}', space=vmem, size = 0x400, scoped, tag = 'output window, operand 0, single buffered']
    #allocation12 [shape = 'u8[512]{0}', space=vmem, size = 0x400, scoped, tag = 'output window, operand 1, single buffered']
    #allocation13 [shape = 's32[1]{0}', space=sflag, size = 0x4, scoped, tag = 'scoped memory for tpu_custom_call.1']
    %11 = vsyncpa [#allocation6], 0
    %12 = vsyncpa [#allocation9], 0
    %13 = vsyncpa [#allocation7], 0
    %14 = vsyncpa [#allocation13], 0
    // Predicated region
    $region2: #{tpu_custom_call.1} parent=1 // pred_check
      _
    $region3: #{tpu_custom_call.1} parent=1 // pred_check_branch
      %16 = sbr.rel (0) target = $region5
    $region4: #{tpu_custom_call.1} parent=1 // pred_region
      %s18 = ssub.s32 256, 256
      %19 = vsyncadd [#allocation6], %s18
      %s20 = sshll.u32 [#allocation5], 4
      %s21 = int_to_ptr.vmem [resolvable:$true] %s20
      %26 = dma.hbm_to_vmem [thread:$0]  %s0, 256, %s21, [#allocation6], 128, 128, 8
    $region5: #{tpu_custom_call.1} parent=1 // pred_fallthru
      _
    // Predicated region
    $region6: #{tpu_custom_call.1} parent=1 // pred_check
      _
    $region7: #{tpu_custom_call.1} parent=1 // pred_check_branch
      %28 = sbr.rel (0) target = $region9
    $region8: #{tpu_custom_call.1} parent=1 // pred_region
      %s30 = ssub.s32 512, 512
      %31 = vsyncadd [#allocation9], %s30
      %s32 = sshll.u32 [#allocation8], 4
      %s33 = int_to_ptr.vmem [resolvable:$true] %s32
      %38 = dma.hbm_to_vmem [thread:$0]  %s1, 512, %s33, [#allocation9], 128, 128, 8
    $region9: #{tpu_custom_call.1} parent=1 // pred_fallthru
      _
    // Predicated region
    $region10: #{tpu_custom_call.1} parent=1 // pred_check
      _
    $region11: #{tpu_custom_call.1} parent=1 // pred_check_branch
      %40 = sbr.rel (0) target = $region13
    $region12: #{tpu_custom_call.1} parent=1 // pred_region
      %s42 = ssub.s32 512, 512
      %43 = vsyncadd [#allocation9], %s42
      %s44 = sshll.u32 [#allocation10], 4
      %s45 = int_to_ptr.vmem [resolvable:$true] %s44
      %50 = dma.hbm_to_vmem [thread:$0]  %s2, 512, %s45, [#allocation9], 128, 128, 8
    $region13: #{tpu_custom_call.1} parent=1 // pred_fallthru
      _
    // Predicated region
    $region14: #{tpu_custom_call.1} parent=1 // pred_check
      _
    $region15: #{tpu_custom_call.1} parent=1 // pred_check_branch
      %52 = sbr.rel (0) target = $region17
    $region16: #{tpu_custom_call.1} parent=1 // pred_region
      _
    $region17: #{tpu_custom_call.1} parent=1 // pred_fallthru
      _
    // Predicated region
    $region18: #{tpu_custom_call.1} parent=1 // pred_check
      _
    $region19: #{tpu_custom_call.1} parent=1 // pred_check_branch
      %54 = sbr.rel (0) target = $region21
    $region20: #{tpu_custom_call.1} parent=1 // pred_region
      %55 = dma.done [#allocation6], 256
    $region21: #{tpu_custom_call.1} parent=1 // pred_fallthru
      _
    // Predicated region
    $region22: #{tpu_custom_call.1} parent=1 // pred_check
      _
    $region23: #{tpu_custom_call.1} parent=1 // pred_check_branch
      %57 = sbr.rel (0) target = $region25
    $region24: #{tpu_custom_call.1} parent=1 // pred_region
      %58 = dma.done [#allocation9], 512
    $region25: #{tpu_custom_call.1} parent=1 // pred_fallthru
      _
    // Predicated region
    $region26: #{tpu_custom_call.1} parent=1 // pred_check
      _
    $region27: #{tpu_custom_call.1} parent=1 // pred_check_branch
      %60 = sbr.rel (0) target = $region29
    $region28: #{tpu_custom_call.1} parent=1 // pred_region
      %61 = dma.done [#allocation9], 512
    $region29: #{tpu_custom_call.1} parent=1 // pred_fallthru
      _
    %p62 = scmp.eq.s32.totalorder 0, 0
    // Predicated region
    $region30: #{tpu_custom_call.1} parent=1 // pred_check
      %p63 = pneg %p62
    $region31: #{tpu_custom_call.1} parent=1 // pred_check_branch
      %65 = sbr.rel (%p63) target = $region33
    $region32: #{tpu_custom_call.1} parent=1 // pred_region
      %vm66 = vcmask 253952
      %67 = vst.msk [vmem:[#allocation3] sm:$0x1] %vm66, 0.0
      %68 = vst.msk [vmem:[#allocation4] sm:$0x1] %vm66, 0.0
    $region33: #{tpu_custom_call.1} parent=1 // pred_fallthru
      _
    %v69 = vld [vmem:[#allocation5] sm:$0xff]
    %v70 = vld [vmem:[#allocation5 + $0x8] sm:$0xff]
    %v71 = vld [vmem:[#allocation8] sm:$0xff]
    %v72 = vld [vmem:[#allocation8 + $0x8] sm:$0xff]
    %v73 = vld [vmem:[#allocation8 + $0x10] sm:$0xff]
    %v74 = vld [vmem:[#allocation8 + $0x18] sm:$0xff]
    %v75 = vld [vmem:[%s3] sm:$0x1]
    %v77 = vlaneseq
    %v78 = vshrl.u32 %v77, 7
    %v79 = vsub.s32 0, %v78
    %v80 = vrot.slane %v75, %v79
    %vm82 = vcmask 261120
    %v84 = vsel %vm82, %v69, 0
    %v87 = vsel %vm82, %v70, 0
    %89 = vmatprep.subr.mxu0 0.0
    %90 = vmatpush1.msra.mxu0 0.0
    %91 = vmatprep.subr.mxu0 0.0
    %92 = vmatpush1.msra.mxu0 0.0
    %93 = vmatprep.subr.mxu0 0.0
    %94 = vmatpush1.msra.mxu0 0.0
    %95 = vmatprep.subr.mxu0 0.0
    %96 = vmatpush1.msra.mxu0 0.0
    %97 = vmatprep.subr.mxu0 0.0
    %98 = vmatpush1.msra.mxu0 0.0
    %99 = vmatprep.subr.mxu0 0.0
    %100 = vmatpush1.msra.mxu0 0.0
    %101 = vmatprep.subr.mxu0 0.0
    %102 = vmatpush1.msra.mxu0 0.0
    %103 = vmatprep.subr.mxu0 0.0
    %104 = vmatpush1.msra.mxu0 0.0
    %105 = vmatprep.subr.mxu0 0.0
    %106 = vmatpush1.msra.mxu0 0.0
    %107 = vmatprep.subr.mxu0 0.0
    %108 = vmatpush1.msra.mxu0 0.0
    %109 = vmatprep.subr.mxu0 0.0
    %110 = vmatpush1.msra.mxu0 0.0
    %111 = vmatprep.subr.mxu0 0.0
    %112 = vmatpush1.msra.mxu0 0.0
    %113 = vmatprep.subr.mxu0 0.0
    %114 = vmatpush1.msra.mxu0 %v74
    %115 = vmatprep.subr.mxu0 0.0
    %116 = vmatpush1.msra.mxu0 %v73
    %117 = vmatprep.subr.mxu0 0.0
    %118 = vmatpush1.msra.mxu0 %v72
    %119 = vmatprep.subr.mxu0 0.0
    %120 = vmatpush1.msra.mxu0 %v71
    %121 = vmatprep.subr.mxu0 0.0
    %122 = vmatpush2.msra.mxu0 0.0
    %123 = vmatprep.subr.mxu0 0.0
    %124 = vmatpush2.msra.mxu0 0.0
    %125 = vmatprep.subr.mxu0 0.0
    %126 = vmatpush2.msra.mxu0 0.0
    %127 = vmatprep.subr.mxu0 0.0
    %128 = vmatpush2.msra.mxu0 0.0
    %129 = vmatprep.subr.mxu0 0.0
    %130 = vmatpush2.msra.mxu0 0.0
    %131 = vmatprep.subr.mxu0 0.0
    %132 = vmatpush2.msra.mxu0 0.0
    %133 = vmatprep.subr.mxu0 0.0
    %134 = vmatpush2.msra.mxu0 0.0
    %135 = vmatprep.subr.mxu0 0.0
    %136 = vmatpush2.msra.mxu0 0.0
    %137 = vmatprep.subr.mxu0 0.0
    %138 = vmatpush2.msra.mxu0 0.0
    %139 = vmatprep.subr.mxu0 0.0
    %140 = vmatpush2.msra.mxu0 0.0
    %141 = vmatprep.subr.mxu0 0.0
    %142 = vmatpush2.msra.mxu0 0.0
    %143 = vmatprep.subr.mxu0 0.0
    %144 = vmatpush2.msra.mxu0 0.0
    %145 = vmatprep.subr.mxu0 0.0
    %146 = vmatpush2.msra.mxu0 0.0
    %147 = vmatprep.subr.mxu0 0.0
    %148 = vmatpush2.msra.mxu0 0.0
    %149 = vmatprep.subr.mxu0 0.0
    %150 = vmatpush2.msra.mxu0 0.0
    %151 = vmatprep.subr.mxu0 0.0
    %152 = vmatpush2.msra.mxu0 0.0
    %153 = vmatprep.mubr.f32.mxu0 0.0
    %154 = vmatmul.mubr.f32.gmra.mxu0 %v84
    %v155 = vpop.f32.mrf.mxu0
    %v156 = vadd.f32 %v80, %v155
    %v157 = vpop.f32.mrf.mxu0
    %158 = vmatprep.mubr.f32.mxu0 0.0
    %159 = vmatmul.mubr.f32.gmra.mxu0 %v87
    %v160 = vpop.f32.mrf.mxu0
    %v161 = vadd.f32 %v80, %v160
    %v162 = vpop.f32.mrf.mxu0
    %163 = vdwg.mxu0
    %164 = vst [vmem:[#allocation2] sm:$0xff] %v156
    %165 = vst [vmem:[#allocation2 + $0x8] sm:$0xff] %v161
    %v166 = vld [vmem:[#allocation10] sm:$0xff]
    %v167 = vld [vmem:[#allocation10 + $0x8] sm:$0xff]
    %v168 = vld [vmem:[#allocation10 + $0x10] sm:$0xff]
    %v169 = vld [vmem:[#allocation10 + $0x18] sm:$0xff]
    %v170 = vld [vmem:[#allocation3] sm:$0x1]
    %v171 = vld [vmem:[#allocation4] sm:$0x1]
    loop: start=0, step=1, limit=2
    $region34: #{tpu_custom_call.1} parent=1 // loop_pre_header
      _
    $region35: #{tpu_custom_call.1} parent=1 // loop_header
      %s173 = sphi 0, %s177
      %p174 = scmp.ge.s32.totalorder %s173, 2
      %v178 = vphi %v170, %v1036
      %v179 = vphi %v171, %v1041
    $region36: #{tpu_custom_call.1} parent=1 // loop_header_branch
      %176 = sbr.rel (%p174) target = $region40
    $region37: #{tpu_custom_call.1} parent=1 // loop_body
      %s180 = smul.u32 %s173, 8
      %s181 = scalar_lea.vmem [#allocation2], %s180
      %v182 = vld [vmem:[%s181] sm:$0xff]
      %v184 = vsel %vm82, %v178, 0
      %186 = vmatprep.subr.mxu0 0.0
      %187 = vmatpush1.msra.mxu0 0.0
      %188 = vmatprep.subr.mxu0 0.0
      %189 = vmatpush1.msra.mxu0 0.0
      %190 = vmatprep.subr.mxu0 0.0
      %191 = vmatpush1.msra.mxu0 0.0
      %192 = vmatprep.subr.mxu0 0.0
      %193 = vmatpush1.msra.mxu0 0.0
      %194 = vmatprep.subr.mxu0 0.0
      %195 = vmatpush1.msra.mxu0 0.0
      %196 = vmatprep.subr.mxu0 0.0
      %197 = vmatpush1.msra.mxu0 0.0
      %198 = vmatprep.subr.mxu0 0.0
      %199 = vmatpush1.msra.mxu0 0.0
      %200 = vmatprep.subr.mxu0 0.0
      %201 = vmatpush1.msra.mxu0 0.0
      %202 = vmatprep.subr.mxu0 0.0
      %203 = vmatpush1.msra.mxu0 0.0
      %204 = vmatprep.subr.mxu0 0.0
      %205 = vmatpush1.msra.mxu0 0.0
      %206 = vmatprep.subr.mxu0 0.0
      %207 = vmatpush1.msra.mxu0 0.0
      %208 = vmatprep.subr.mxu0 0.0
      %209 = vmatpush1.msra.mxu0 0.0
      %210 = vmatprep.subr.mxu0 0.0
      %211 = vmatpush1.msra.mxu0 %v169
      %212 = vmatprep.subr.mxu0 0.0
      %213 = vmatpush1.msra.mxu0 %v168
      %214 = vmatprep.subr.mxu0 0.0
      %215 = vmatpush1.msra.mxu0 %v167
      %216 = vmatprep.subr.mxu0 0.0
      %217 = vmatpush1.msra.mxu0 %v166
      %218 = vmatprep.subr.mxu0 0.0
      %219 = vmatpush2.msra.mxu0 0.0
      %220 = vmatprep.subr.mxu0 0.0
      %221 = vmatpush2.msra.mxu0 0.0
      %222 = vmatprep.subr.mxu0 0.0
      %223 = vmatpush2.msra.mxu0 0.0
      %224 = vmatprep.subr.mxu0 0.0
      %225 = vmatpush2.msra.mxu0 0.0
      %226 = vmatprep.subr.mxu0 0.0
      %227 = vmatpush2.msra.mxu0 0.0
      %228 = vmatprep.subr.mxu0 0.0
      %229 = vmatpush2.msra.mxu0 0.0
      %230 = vmatprep.subr.mxu0 0.0
      %231 = vmatpush2.msra.mxu0 0.0
      %232 = vmatprep.subr.mxu0 0.0
      %233 = vmatpush2.msra.mxu0 0.0
      %234 = vmatprep.subr.mxu0 0.0
      %235 = vmatpush2.msra.mxu0 0.0
      %236 = vmatprep.subr.mxu0 0.0
      %237 = vmatpush2.msra.mxu0 0.0
      %238 = vmatprep.subr.mxu0 0.0
      %239 = vmatpush2.msra.mxu0 0.0
      %240 = vmatprep.subr.mxu0 0.0
      %241 = vmatpush2.msra.mxu0 0.0
      %242 = vmatprep.subr.mxu0 0.0
      %243 = vmatpush2.msra.mxu0 0.0
      %244 = vmatprep.subr.mxu0 0.0
      %245 = vmatpush2.msra.mxu0 0.0
      %246 = vmatprep.subr.mxu0 0.0
      %247 = vmatpush2.msra.mxu0 0.0
      %248 = vmatprep.subr.mxu0 0.0
      %249 = vmatpush2.msra.mxu0 0.0
      %250 = vmatprep.mubr.f32.mxu0 0.0
      %251 = vmatmul.mubr.f32.gmra.mxu0 %v184
      %v252 = vpop.f32.mrf.mxu0
      %v253 = vadd.f32 0.0, %v252
      %v254 = vpop.f32.mrf.mxu0
      %255 = vdwg.mxu0
      %v256 = vadd.f32 %v182, %v253
      %v257 = vxor.u32 %v256, 2147483648
      %v258 = vmul.f32 %v257, 1.442695
      %v259 = vpow.pop %v258
      %v260 = vadd.f32 %v259, 1.0
      %v261 = vrcp.pop %v260
      %v262 = vmul.f32 1.0, %v261
      %v263 = vtanh.pop %v256
      %265 = vrot.lane.b32.xlu0 %v179, 32
      %v266 = vpop.permute.xlu0 %265
      %v268 = vmul.f32 %v262, %v266
      %270 = vrot.lane.b32.xlu0 %v263, 64
      %v271 = vpop.permute.xlu0 %270
      %v273 = vmul.f32 %v262, %v271
      %275 = vrot.lane.b32.xlu0 %v273, 32
      %v276 = vpop.permute.xlu0 %275
      %v278 = vadd.f32 %v268, %v276
      %v279 = vtanh.pop %v278
      %281 = vrot.lane.b32.xlu0 %v279, 64
      %v282 = vpop.permute.xlu0 %281
      %v284 = vmul.f32 %v262, %v282
      %286 = vrot.lane.b32.xlu0 %v284, 32
      %v287 = vpop.permute.xlu0 %286
      %v288 = vsel %vm82, %v287, 0
      %290 = vmatprep.subr.mxu0 0.0
      %291 = vmatpush1.msra.mxu0 0.0
      %292 = vmatprep.subr.mxu0 0.0
      %293 = vmatpush1.msra.mxu0 0.0
      %294 = vmatprep.subr.mxu0 0.0
      %295 = vmatpush1.msra.mxu0 0.0
      %296 = vmatprep.subr.mxu0 0.0
      %297 = vmatpush1.msra.mxu0 0.0
      %298 = vmatprep.subr.mxu0 0.0
      %299 = vmatpush1.msra.mxu0 0.0
      %300 = vmatprep.subr.mxu0 0.0
      %301 = vmatpush1.msra.mxu0 0.0
      %302 = vmatprep.subr.mxu0 0.0
      %303 = vmatpush1.msra.mxu0 0.0
      %304 = vmatprep.subr.mxu0 0.0
      %305 = vmatpush1.msra.mxu0 0.0
      %306 = vmatprep.subr.mxu0 0.0
      %307 = vmatpush1.msra.mxu0 0.0
      %308 = vmatprep.subr.mxu0 0.0
      %309 = vmatpush1.msra.mxu0 0.0
      %310 = vmatprep.subr.mxu0 0.0
      %311 = vmatpush1.msra.mxu0 0.0
      %312 = vmatprep.subr.mxu0 0.0
      %313 = vmatpush1.msra.mxu0 0.0
      %314 = vmatprep.subr.mxu0 0.0
      %315 = vmatpush1.msra.mxu0 %v169
      %316 = vmatprep.subr.mxu0 0.0
      %317 = vmatpush1.msra.mxu0 %v168
      %318 = vmatprep.subr.mxu0 0.0
      %319 = vmatpush1.msra.mxu0 %v167
      %320 = vmatprep.subr.mxu0 0.0
      %321 = vmatpush1.msra.mxu0 %v166
      %322 = vmatprep.subr.mxu0 0.0
      %323 = vmatpush2.msra.mxu0 0.0
      %324 = vmatprep.subr.mxu0 0.0
      %325 = vmatpush2.msra.mxu0 0.0
      %326 = vmatprep.subr.mxu0 0.0
      %327 = vmatpush2.msra.mxu0 0.0
      %328 = vmatprep.subr.mxu0 0.0
      %329 = vmatpush2.msra.mxu0 0.0
      %330 = vmatprep.subr.mxu0 0.0
      %331 = vmatpush2.msra.mxu0 0.0
      %332 = vmatprep.subr.mxu0 0.0
      %333 = vmatpush2.msra.mxu0 0.0
      %334 = vmatprep.subr.mxu0 0.0
      %335 = vmatpush2.msra.mxu0 0.0
      %336 = vmatprep.subr.mxu0 0.0
      %337 = vmatpush2.msra.mxu0 0.0
      %338 = vmatprep.subr.mxu0 0.0
      %339 = vmatpush2.msra.mxu0 0.0
      %340 = vmatprep.subr.mxu0 0.0
      %341 = vmatpush2.msra.mxu0 0.0
      %342 = vmatprep.subr.mxu0 0.0
      %343 = vmatpush2.msra.mxu0 0.0
      %344 = vmatprep.subr.mxu0 0.0
      %345 = vmatpush2.msra.mxu0 0.0
      %346 = vmatprep.subr.mxu0 0.0
      %347 = vmatpush2.msra.mxu0 0.0
      %348 = vmatprep.subr.mxu0 0.0
      %349 = vmatpush2.msra.mxu0 0.0
      %350 = vmatprep.subr.mxu0 0.0
      %351 = vmatpush2.msra.mxu0 0.0
      %352 = vmatprep.subr.mxu0 0.0
      %353 = vmatpush2.msra.mxu0 0.0
      %354 = vmatprep.mubr.f32.mxu0 0.0
      %355 = vmatmul.mubr.f32.gmra.mxu0 %v288
      %v356 = vpop.f32.mrf.mxu0
      %v357 = vadd.f32 0.0, %v356
      %v358 = vpop.f32.mrf.mxu0
      %359 = vdwg.mxu0
      %v361 = vrot.slane %v357, 7
      %v363 = vadd.f32 %v182, %v361
      %v364 = vxor.u32 %v363, 2147483648
      %v365 = vmul.f32 %v364, 1.442695
      %v366 = vpow.pop %v365
      %v367 = vadd.f32 %v366, 1.0
      %v368 = vrcp.pop %v367
      %v369 = vmul.f32 1.0, %v368
      %v370 = vtanh.pop %v363
      %v372 = vrot.slane %v278, 7
      %v374 = vmul.f32 %v369, %v372
      %376 = vrot.lane.b32.xlu0 %v370, 64
      %v377 = vpop.permute.xlu0 %376
      %v379 = vmul.f32 %v369, %v377
      %381 = vrot.lane.b32.xlu0 %v379, 32
      %v382 = vpop.permute.xlu0 %381
      %v384 = vadd.f32 %v374, %v382
      %v385 = vtanh.pop %v384
      %387 = vrot.lane.b32.xlu0 %v385, 64
      %v388 = vpop.permute.xlu0 %387
      %v390 = vmul.f32 %v369, %v388
      %v392 = vrot.slane %v390, 1
      %393 = vrot.lane.b32.xlu0 %v392, 32
      %v394 = vpop.permute.xlu0 %393
      %v395 = vsel %vm82, %v394, 0
      %397 = vmatprep.subr.mxu0 0.0
      %398 = vmatpush1.msra.mxu0 0.0
      %399 = vmatprep.subr.mxu0 0.0
      %400 = vmatpush1.msra.mxu0 0.0
      %401 = vmatprep.subr.mxu0 0.0
      %402 = vmatpush1.msra.mxu0 0.0
      %403 = vmatprep.subr.mxu0 0.0
      %404 = vmatpush1.msra.mxu0 0.0
      %405 = vmatprep.subr.mxu0 0.0
      %406 = vmatpush1.msra.mxu0 0.0
      %407 = vmatprep.subr.mxu0 0.0
      %408 = vmatpush1.msra.mxu0 0.0
      %409 = vmatprep.subr.mxu0 0.0
      %410 = vmatpush1.msra.mxu0 0.0
      %411 = vmatprep.subr.mxu0 0.0
      %412 = vmatpush1.msra.mxu0 0.0
      %413 = vmatprep.subr.mxu0 0.0
      %414 = vmatpush1.msra.mxu0 0.0
      %415 = vmatprep.subr.mxu0 0.0
      %416 = vmatpush1.msra.mxu0 0.0
      %417 = vmatprep.subr.mxu0 0.0
      %418 = vmatpush1.msra.mxu0 0.0
      %419 = vmatprep.subr.mxu0 0.0
      %420 = vmatpush1.msra.mxu0 0.0
      %421 = vmatprep.subr.mxu0 0.0
      %422 = vmatpush1.msra.mxu0 %v169
      %423 = vmatprep.subr.mxu0 0.0
      %424 = vmatpush1.msra.mxu0 %v168
      %425 = vmatprep.subr.mxu0 0.0
      %426 = vmatpush1.msra.mxu0 %v167
      %427 = vmatprep.subr.mxu0 0.0
      %428 = vmatpush1.msra.mxu0 %v166
      %429 = vmatprep.subr.mxu0 0.0
      %430 = vmatpush2.msra.mxu0 0.0
      %431 = vmatprep.subr.mxu0 0.0
      %432 = vmatpush2.msra.mxu0 0.0
      %433 = vmatprep.subr.mxu0 0.0
      %434 = vmatpush2.msra.mxu0 0.0
      %435 = vmatprep.subr.mxu0 0.0
      %436 = vmatpush2.msra.mxu0 0.0
      %437 = vmatprep.subr.mxu0 0.0
      %438 = vmatpush2.msra.mxu0 0.0
      %439 = vmatprep.subr.mxu0 0.0
      %440 = vmatpush2.msra.mxu0 0.0
      %441 = vmatprep.subr.mxu0 0.0
      %442 = vmatpush2.msra.mxu0 0.0
      %443 = vmatprep.subr.mxu0 0.0
      %444 = vmatpush2.msra.mxu0 0.0
      %445 = vmatprep.subr.mxu0 0.0
      %446 = vmatpush2.msra.mxu0 0.0
      %447 = vmatprep.subr.mxu0 0.0
      %448 = vmatpush2.msra.mxu0 0.0
      %449 = vmatprep.subr.mxu0 0.0
      %450 = vmatpush2.msra.mxu0 0.0
      %451 = vmatprep.subr.mxu0 0.0
      %452 = vmatpush2.msra.mxu0 0.0
      %453 = vmatprep.subr.mxu0 0.0
      %454 = vmatpush2.msra.mxu0 0.0
      %455 = vmatprep.subr.mxu0 0.0
      %456 = vmatpush2.msra.mxu0 0.0
      %457 = vmatprep.subr.mxu0 0.0
      %458 = vmatpush2.msra.mxu0 0.0
      %459 = vmatprep.subr.mxu0 0.0
      %460 = vmatpush2.msra.mxu0 0.0
      %461 = vmatprep.mubr.f32.mxu0 0.0
      %462 = vmatmul.mubr.f32.gmra.mxu0 %v395
      %v463 = vpop.f32.mrf.mxu0
      %v464 = vadd.f32 0.0, %v463
      %v465 = vpop.f32.mrf.mxu0
      %466 = vdwg.mxu0
      %v468 = vrot.slane %v464, 6
      %v470 = vadd.f32 %v182, %v468
      %v471 = vxor.u32 %v470, 2147483648
      %v472 = vmul.f32 %v471, 1.442695
      %v473 = vpow.pop %v472
      %v474 = vadd.f32 %v473, 1.0
      %v475 = vrcp.pop %v474
      %v476 = vmul.f32 1.0, %v475
      %v477 = vtanh.pop %v470
      %v479 = vrot.slane %v384, 7
      %v481 = vmul.f32 %v476, %v479
      %483 = vrot.lane.b32.xlu0 %v477, 64
      %v484 = vpop.permute.xlu0 %483
      %v486 = vmul.f32 %v476, %v484
      %488 = vrot.lane.b32.xlu0 %v486, 32
      %v489 = vpop.permute.xlu0 %488
      %v491 = vadd.f32 %v481, %v489
      %v492 = vtanh.pop %v491
      %494 = vrot.lane.b32.xlu0 %v492, 64
      %v495 = vpop.permute.xlu0 %494
      %v497 = vmul.f32 %v476, %v495
      %v499 = vrot.slane %v497, 2
      %500 = vrot.lane.b32.xlu0 %v499, 32
      %v501 = vpop.permute.xlu0 %500
      %v502 = vsel %vm82, %v501, 0
      %504 = vmatprep.subr.mxu0 0.0
      %505 = vmatpush1.msra.mxu0 0.0
      %506 = vmatprep.subr.mxu0 0.0
      %507 = vmatpush1.msra.mxu0 0.0
      %508 = vmatprep.subr.mxu0 0.0
      %509 = vmatpush1.msra.mxu0 0.0
      %510 = vmatprep.subr.mxu0 0.0
      %511 = vmatpush1.msra.mxu0 0.0
      %512 = vmatprep.subr.mxu0 0.0
      %513 = vmatpush1.msra.mxu0 0.0
      %514 = vmatprep.subr.mxu0 0.0
      %515 = vmatpush1.msra.mxu0 0.0
      %516 = vmatprep.subr.mxu0 0.0
      %517 = vmatpush1.msra.mxu0 0.0
      %518 = vmatprep.subr.mxu0 0.0
      %519 = vmatpush1.msra.mxu0 0.0
      %520 = vmatprep.subr.mxu0 0.0
      %521 = vmatpush1.msra.mxu0 0.0
      %522 = vmatprep.subr.mxu0 0.0
      %523 = vmatpush1.msra.mxu0 0.0
      %524 = vmatprep.subr.mxu0 0.0
      %525 = vmatpush1.msra.mxu0 0.0
      %526 = vmatprep.subr.mxu0 0.0
      %527 = vmatpush1.msra.mxu0 0.0
      %528 = vmatprep.subr.mxu0 0.0
      %529 = vmatpush1.msra.mxu0 %v169
      %530 = vmatprep.subr.mxu0 0.0
      %531 = vmatpush1.msra.mxu0 %v168
      %532 = vmatprep.subr.mxu0 0.0
      %533 = vmatpush1.msra.mxu0 %v167
      %534 = vmatprep.subr.mxu0 0.0
      %535 = vmatpush1.msra.mxu0 %v166
      %536 = vmatprep.subr.mxu0 0.0
      %537 = vmatpush2.msra.mxu0 0.0
      %538 = vmatprep.subr.mxu0 0.0
      %539 = vmatpush2.msra.mxu0 0.0
      %540 = vmatprep.subr.mxu0 0.0
      %541 = vmatpush2.msra.mxu0 0.0
      %542 = vmatprep.subr.mxu0 0.0
      %543 = vmatpush2.msra.mxu0 0.0
      %544 = vmatprep.subr.mxu0 0.0
      %545 = vmatpush2.msra.mxu0 0.0
      %546 = vmatprep.subr.mxu0 0.0
      %547 = vmatpush2.msra.mxu0 0.0
      %548 = vmatprep.subr.mxu0 0.0
      %549 = vmatpush2.msra.mxu0 0.0
      %550 = vmatprep.subr.mxu0 0.0
      %551 = vmatpush2.msra.mxu0 0.0
      %552 = vmatprep.subr.mxu0 0.0
      %553 = vmatpush2.msra.mxu0 0.0
      %554 = vmatprep.subr.mxu0 0.0
      %555 = vmatpush2.msra.mxu0 0.0
      %556 = vmatprep.subr.mxu0 0.0
      %557 = vmatpush2.msra.mxu0 0.0
      %558 = vmatprep.subr.mxu0 0.0
      %559 = vmatpush2.msra.mxu0 0.0
      %560 = vmatprep.subr.mxu0 0.0
      %561 = vmatpush2.msra.mxu0 0.0
      %562 = vmatprep.subr.mxu0 0.0
      %563 = vmatpush2.msra.mxu0 0.0
      %564 = vmatprep.subr.mxu0 0.0
      %565 = vmatpush2.msra.mxu0 0.0
      %566 = vmatprep.subr.mxu0 0.0
      %567 = vmatpush2.msra.mxu0 0.0
      %568 = vmatprep.mubr.f32.mxu0 0.0
      %569 = vmatmul.mubr.f32.gmra.mxu0 %v502
      %v570 = vpop.f32.mrf.mxu0
      %v571 = vadd.f32 0.0, %v570
      %v572 = vpop.f32.mrf.mxu0
      %573 = vdwg.mxu0
      %v575 = vrot.slane %v571, 5
      %v577 = vadd.f32 %v182, %v575
      %v578 = vxor.u32 %v577, 2147483648
      %v579 = vmul.f32 %v578, 1.442695
      %v580 = vpow.pop %v579
      %v581 = vadd.f32 %v580, 1.0
      %v582 = vrcp.pop %v581
      %v583 = vmul.f32 1.0, %v582
      %v584 = vtanh.pop %v577
      %v586 = vrot.slane %v491, 7
      %v588 = vmul.f32 %v583, %v586
      %590 = vrot.lane.b32.xlu0 %v584, 64
      %v591 = vpop.permute.xlu0 %590
      %v593 = vmul.f32 %v583, %v591
      %595 = vrot.lane.b32.xlu0 %v593, 32
      %v596 = vpop.permute.xlu0 %595
      %v598 = vadd.f32 %v588, %v596
      %v599 = vtanh.pop %v598
      %601 = vrot.lane.b32.xlu0 %v599, 64
      %v602 = vpop.permute.xlu0 %601
      %v604 = vmul.f32 %v583, %v602
      %v606 = vrot.slane %v604, 3
      %607 = vrot.lane.b32.xlu0 %v606, 32
      %v608 = vpop.permute.xlu0 %607
      %v609 = vsel %vm82, %v608, 0
      %611 = vmatprep.subr.mxu0 0.0
      %612 = vmatpush1.msra.mxu0 0.0
      %613 = vmatprep.subr.mxu0 0.0
      %614 = vmatpush1.msra.mxu0 0.0
      %615 = vmatprep.subr.mxu0 0.0
      %616 = vmatpush1.msra.mxu0 0.0
      %617 = vmatprep.subr.mxu0 0.0
      %618 = vmatpush1.msra.mxu0 0.0
      %619 = vmatprep.subr.mxu0 0.0
      %620 = vmatpush1.msra.mxu0 0.0
      %621 = vmatprep.subr.mxu0 0.0
      %622 = vmatpush1.msra.mxu0 0.0
      %623 = vmatprep.subr.mxu0 0.0
      %624 = vmatpush1.msra.mxu0 0.0
      %625 = vmatprep.subr.mxu0 0.0
      %626 = vmatpush1.msra.mxu0 0.0
      %627 = vmatprep.subr.mxu0 0.0
      %628 = vmatpush1.msra.mxu0 0.0
      %629 = vmatprep.subr.mxu0 0.0
      %630 = vmatpush1.msra.mxu0 0.0
      %631 = vmatprep.subr.mxu0 0.0
      %632 = vmatpush1.msra.mxu0 0.0
      %633 = vmatprep.subr.mxu0 0.0
      %634 = vmatpush1.msra.mxu0 0.0
      %635 = vmatprep.subr.mxu0 0.0
      %636 = vmatpush1.msra.mxu0 %v169
      %637 = vmatprep.subr.mxu0 0.0
      %638 = vmatpush1.msra.mxu0 %v168
      %639 = vmatprep.subr.mxu0 0.0
      %640 = vmatpush1.msra.mxu0 %v167
      %641 = vmatprep.subr.mxu0 0.0
      %642 = vmatpush1.msra.mxu0 %v166
      %643 = vmatprep.subr.mxu0 0.0
      %644 = vmatpush2.msra.mxu0 0.0
      %645 = vmatprep.subr.mxu0 0.0
      %646 = vmatpush2.msra.mxu0 0.0
      %647 = vmatprep.subr.mxu0 0.0
      %648 = vmatpush2.msra.mxu0 0.0
      %649 = vmatprep.subr.mxu0 0.0
      %650 = vmatpush2.msra.mxu0 0.0
      %651 = vmatprep.subr.mxu0 0.0
      %652 = vmatpush2.msra.mxu0 0.0
      %653 = vmatprep.subr.mxu0 0.0
      %654 = vmatpush2.msra.mxu0 0.0
      %655 = vmatprep.subr.mxu0 0.0
      %656 = vmatpush2.msra.mxu0 0.0
      %657 = vmatprep.subr.mxu0 0.0
      %658 = vmatpush2.msra.mxu0 0.0
      %659 = vmatprep.subr.mxu0 0.0
      %660 = vmatpush2.msra.mxu0 0.0
      %661 = vmatprep.subr.mxu0 0.0
      %662 = vmatpush2.msra.mxu0 0.0
      %663 = vmatprep.subr.mxu0 0.0
      %664 = vmatpush2.msra.mxu0 0.0
      %665 = vmatprep.subr.mxu0 0.0
      %666 = vmatpush2.msra.mxu0 0.0
      %667 = vmatprep.subr.mxu0 0.0
      %668 = vmatpush2.msra.mxu0 0.0
      %669 = vmatprep.subr.mxu0 0.0
      %670 = vmatpush2.msra.mxu0 0.0
      %671 = vmatprep.subr.mxu0 0.0
      %672 = vmatpush2.msra.mxu0 0.0
      %673 = vmatprep.subr.mxu0 0.0
      %674 = vmatpush2.msra.mxu0 0.0
      %675 = vmatprep.mubr.f32.mxu0 0.0
      %676 = vmatmul.mubr.f32.gmra.mxu0 %v609
      %v677 = vpop.f32.mrf.mxu0
      %v678 = vadd.f32 0.0, %v677
      %v679 = vpop.f32.mrf.mxu0
      %680 = vdwg.mxu0
      %v682 = vrot.slane %v678, 4
      %v684 = vadd.f32 %v182, %v682
      %v685 = vxor.u32 %v684, 2147483648
      %v686 = vmul.f32 %v685, 1.442695
      %v687 = vpow.pop %v686
      %v688 = vadd.f32 %v687, 1.0
      %v689 = vrcp.pop %v688
      %v690 = vmul.f32 1.0, %v689
      %v691 = vtanh.pop %v684
      %v693 = vrot.slane %v598, 7
      %v695 = vmul.f32 %v690, %v693
      %697 = vrot.lane.b32.xlu0 %v691, 64
      %v698 = vpop.permute.xlu0 %697
      %v700 = vmul.f32 %v690, %v698
      %702 = vrot.lane.b32.xlu0 %v700, 32
      %v703 = vpop.permute.xlu0 %702
      %v705 = vadd.f32 %v695, %v703
      %v706 = vtanh.pop %v705
      %708 = vrot.lane.b32.xlu0 %v706, 64
      %v709 = vpop.permute.xlu0 %708
      %v711 = vmul.f32 %v690, %v709
      %v713 = vrot.slane %v711, 4
      %714 = vrot.lane.b32.xlu0 %v713, 32
      %v715 = vpop.permute.xlu0 %714
      %v716 = vsel %vm82, %v715, 0
      %718 = vmatprep.subr.mxu0 0.0
      %719 = vmatpush1.msra.mxu0 0.0
      %720 = vmatprep.subr.mxu0 0.0
      %721 = vmatpush1.msra.mxu0 0.0
      %722 = vmatprep.subr.mxu0 0.0
      %723 = vmatpush1.msra.mxu0 0.0
      %724 = vmatprep.subr.mxu0 0.0
      %725 = vmatpush1.msra.mxu0 0.0
      %726 = vmatprep.subr.mxu0 0.0
      %727 = vmatpush1.msra.mxu0 0.0
      %728 = vmatprep.subr.mxu0 0.0
      %729 = vmatpush1.msra.mxu0 0.0
      %730 = vmatprep.subr.mxu0 0.0
      %731 = vmatpush1.msra.mxu0 0.0
      %732 = vmatprep.subr.mxu0 0.0
      %733 = vmatpush1.msra.mxu0 0.0
      %734 = vmatprep.subr.mxu0 0.0
      %735 = vmatpush1.msra.mxu0 0.0
      %736 = vmatprep.subr.mxu0 0.0
      %737 = vmatpush1.msra.mxu0 0.0
      %738 = vmatprep.subr.mxu0 0.0
      %739 = vmatpush1.msra.mxu0 0.0
      %740 = vmatprep.subr.mxu0 0.0
      %741 = vmatpush1.msra.mxu0 0.0
      %742 = vmatprep.subr.mxu0 0.0
      %743 = vmatpush1.msra.mxu0 %v169
      %744 = vmatprep.subr.mxu0 0.0
      %745 = vmatpush1.msra.mxu0 %v168
      %746 = vmatprep.subr.mxu0 0.0
      %747 = vmatpush1.msra.mxu0 %v167
      %748 = vmatprep.subr.mxu0 0.0
      %749 = vmatpush1.msra.mxu0 %v166
      %750 = vmatprep.subr.mxu0 0.0
      %751 = vmatpush2.msra.mxu0 0.0
      %752 = vmatprep.subr.mxu0 0.0
      %753 = vmatpush2.msra.mxu0 0.0
      %754 = vmatprep.subr.mxu0 0.0
      %755 = vmatpush2.msra.mxu0 0.0
      %756 = vmatprep.subr.mxu0 0.0
      %757 = vmatpush2.msra.mxu0 0.0
      %758 = vmatprep.subr.mxu0 0.0
      %759 = vmatpush2.msra.mxu0 0.0
      %760 = vmatprep.subr.mxu0 0.0
      %761 = vmatpush2.msra.mxu0 0.0
      %762 = vmatprep.subr.mxu0 0.0
      %763 = vmatpush2.msra.mxu0 0.0
      %764 = vmatprep.subr.mxu0 0.0
      %765 = vmatpush2.msra.mxu0 0.0
      %766 = vmatprep.subr.mxu0 0.0
      %767 = vmatpush2.msra.mxu0 0.0
      %768 = vmatprep.subr.mxu0 0.0
      %769 = vmatpush2.msra.mxu0 0.0
      %770 = vmatprep.subr.mxu0 0.0
      %771 = vmatpush2.msra.mxu0 0.0
      %772 = vmatprep.subr.mxu0 0.0
      %773 = vmatpush2.msra.mxu0 0.0
      %774 = vmatprep.subr.mxu0 0.0
      %775 = vmatpush2.msra.mxu0 0.0
      %776 = vmatprep.subr.mxu0 0.0
      %777 = vmatpush2.msra.mxu0 0.0
      %778 = vmatprep.subr.mxu0 0.0
      %779 = vmatpush2.msra.mxu0 0.0
      %780 = vmatprep.subr.mxu0 0.0
      %781 = vmatpush2.msra.mxu0 0.0
      %782 = vmatprep.mubr.f32.mxu0 0.0
      %783 = vmatmul.mubr.f32.gmra.mxu0 %v716
      %v784 = vpop.f32.mrf.mxu0
      %v785 = vadd.f32 0.0, %v784
      %v786 = vpop.f32.mrf.mxu0
      %787 = vdwg.mxu0
      %v789 = vrot.slane %v785, 3
      %v791 = vadd.f32 %v182, %v789
      %v792 = vxor.u32 %v791, 2147483648
      %v793 = vmul.f32 %v792, 1.442695
      %v794 = vpow.pop %v793
      %v795 = vadd.f32 %v794, 1.0
      %v796 = vrcp.pop %v795
      %v797 = vmul.f32 1.0, %v796
      %v798 = vtanh.pop %v791
      %v800 = vrot.slane %v705, 7
      %v802 = vmul.f32 %v797, %v800
      %804 = vrot.lane.b32.xlu0 %v798, 64
      %v805 = vpop.permute.xlu0 %804
      %v807 = vmul.f32 %v797, %v805
      %809 = vrot.lane.b32.xlu0 %v807, 32
      %v810 = vpop.permute.xlu0 %809
      %v812 = vadd.f32 %v802, %v810
      %v813 = vtanh.pop %v812
      %815 = vrot.lane.b32.xlu0 %v813, 64
      %v816 = vpop.permute.xlu0 %815
      %v818 = vmul.f32 %v797, %v816
      %v820 = vrot.slane %v818, 5
      %821 = vrot.lane.b32.xlu0 %v820, 32
      %v822 = vpop.permute.xlu0 %821
      %v823 = vsel %vm82, %v822, 0
      %825 = vmatprep.subr.mxu0 0.0
      %826 = vmatpush1.msra.mxu0 0.0
      %827 = vmatprep.subr.mxu0 0.0
      %828 = vmatpush1.msra.mxu0 0.0
      %829 = vmatprep.subr.mxu0 0.0
      %830 = vmatpush1.msra.mxu0 0.0
      %831 = vmatprep.subr.mxu0 0.0
      %832 = vmatpush1.msra.mxu0 0.0
      %833 = vmatprep.subr.mxu0 0.0
      %834 = vmatpush1.msra.mxu0 0.0
      %835 = vmatprep.subr.mxu0 0.0
      %836 = vmatpush1.msra.mxu0 0.0
      %837 = vmatprep.subr.mxu0 0.0
      %838 = vmatpush1.msra.mxu0 0.0
      %839 = vmatprep.subr.mxu0 0.0
      %840 = vmatpush1.msra.mxu0 0.0
      %841 = vmatprep.subr.mxu0 0.0
      %842 = vmatpush1.msra.mxu0 0.0
      %843 = vmatprep.subr.mxu0 0.0
      %844 = vmatpush1.msra.mxu0 0.0
      %845 = vmatprep.subr.mxu0 0.0
      %846 = vmatpush1.msra.mxu0 0.0
      %847 = vmatprep.subr.mxu0 0.0
      %848 = vmatpush1.msra.mxu0 0.0
      %849 = vmatprep.subr.mxu0 0.0
      %850 = vmatpush1.msra.mxu0 %v169
      %851 = vmatprep.subr.mxu0 0.0
      %852 = vmatpush1.msra.mxu0 %v168
      %853 = vmatprep.subr.mxu0 0.0
      %854 = vmatpush1.msra.mxu0 %v167
      %855 = vmatprep.subr.mxu0 0.0
      %856 = vmatpush1.msra.mxu0 %v166
      %857 = vmatprep.subr.mxu0 0.0
      %858 = vmatpush2.msra.mxu0 0.0
      %859 = vmatprep.subr.mxu0 0.0
      %860 = vmatpush2.msra.mxu0 0.0
      %861 = vmatprep.subr.mxu0 0.0
      %862 = vmatpush2.msra.mxu0 0.0
      %863 = vmatprep.subr.mxu0 0.0
      %864 = vmatpush2.msra.mxu0 0.0
      %865 = vmatprep.subr.mxu0 0.0
      %866 = vmatpush2.msra.mxu0 0.0
      %867 = vmatprep.subr.mxu0 0.0
      %868 = vmatpush2.msra.mxu0 0.0
      %869 = vmatprep.subr.mxu0 0.0
      %870 = vmatpush2.msra.mxu0 0.0
      %871 = vmatprep.subr.mxu0 0.0
      %872 = vmatpush2.msra.mxu0 0.0
      %873 = vmatprep.subr.mxu0 0.0
      %874 = vmatpush2.msra.mxu0 0.0
      %875 = vmatprep.subr.mxu0 0.0
      %876 = vmatpush2.msra.mxu0 0.0
      %877 = vmatprep.subr.mxu0 0.0
      %878 = vmatpush2.msra.mxu0 0.0
      %879 = vmatprep.subr.mxu0 0.0
      %880 = vmatpush2.msra.mxu0 0.0
      %881 = vmatprep.subr.mxu0 0.0
      %882 = vmatpush2.msra.mxu0 0.0
      %883 = vmatprep.subr.mxu0 0.0
      %884 = vmatpush2.msra.mxu0 0.0
      %885 = vmatprep.subr.mxu0 0.0
      %886 = vmatpush2.msra.mxu0 0.0
      %887 = vmatprep.subr.mxu0 0.0
      %888 = vmatpush2.msra.mxu0 0.0
      %889 = vmatprep.mubr.f32.mxu0 0.0
      %890 = vmatmul.mubr.f32.gmra.mxu0 %v823
      %v891 = vpop.f32.mrf.mxu0
      %v892 = vadd.f32 0.0, %v891
      %v893 = vpop.f32.mrf.mxu0
      %894 = vdwg.mxu0
      %v896 = vrot.slane %v892, 2
      %v898 = vadd.f32 %v182, %v896
      %v899 = vxor.u32 %v898, 2147483648
      %v900 = vmul.f32 %v899, 1.442695
      %v901 = vpow.pop %v900
      %v902 = vadd.f32 %v901, 1.0
      %v903 = vrcp.pop %v902
      %v904 = vmul.f32 1.0, %v903
      %v905 = vtanh.pop %v898
      %v907 = vrot.slane %v812, 7
      %v909 = vmul.f32 %v904, %v907
      %911 = vrot.lane.b32.xlu0 %v905, 64
      %v912 = vpop.permute.xlu0 %911
      %v914 = vmul.f32 %v904, %v912
      %916 = vrot.lane.b32.xlu0 %v914, 32
      %v917 = vpop.permute.xlu0 %916
      %v919 = vadd.f32 %v909, %v917
      %v920 = vtanh.pop %v919
      %922 = vrot.lane.b32.xlu0 %v920, 64
      %v923 = vpop.permute.xlu0 %922
      %v925 = vmul.f32 %v904, %v923
      %v927 = vrot.slane %v925, 6
      %928 = vrot.lane.b32.xlu0 %v927, 32
      %v929 = vpop.permute.xlu0 %928
      %v930 = vsel %vm82, %v929, 0
      %932 = vmatprep.subr.mxu0 0.0
      %933 = vmatpush1.msra.mxu0 0.0
      %934 = vmatprep.subr.mxu0 0.0
      %935 = vmatpush1.msra.mxu0 0.0
      %936 = vmatprep.subr.mxu0 0.0
      %937 = vmatpush1.msra.mxu0 0.0
      %938 = vmatprep.subr.mxu0 0.0
      %939 = vmatpush1.msra.mxu0 0.0
      %940 = vmatprep.subr.mxu0 0.0
      %941 = vmatpush1.msra.mxu0 0.0
      %942 = vmatprep.subr.mxu0 0.0
      %943 = vmatpush1.msra.mxu0 0.0
      %944 = vmatprep.subr.mxu0 0.0
      %945 = vmatpush1.msra.mxu0 0.0
      %946 = vmatprep.subr.mxu0 0.0
      %947 = vmatpush1.msra.mxu0 0.0
      %948 = vmatprep.subr.mxu0 0.0
      %949 = vmatpush1.msra.mxu0 0.0
      %950 = vmatprep.subr.mxu0 0.0
      %951 = vmatpush1.msra.mxu0 0.0
      %952 = vmatprep.subr.mxu0 0.0
      %953 = vmatpush1.msra.mxu0 0.0
      %954 = vmatprep.subr.mxu0 0.0
      %955 = vmatpush1.msra.mxu0 0.0
      %956 = vmatprep.subr.mxu0 0.0
      %957 = vmatpush1.msra.mxu0 %v169
      %958 = vmatprep.subr.mxu0 0.0
      %959 = vmatpush1.msra.mxu0 %v168
      %960 = vmatprep.subr.mxu0 0.0
      %961 = vmatpush1.msra.mxu0 %v167
      %962 = vmatprep.subr.mxu0 0.0
      %963 = vmatpush1.msra.mxu0 %v166
      %964 = vmatprep.subr.mxu0 0.0
      %965 = vmatpush2.msra.mxu0 0.0
      %966 = vmatprep.subr.mxu0 0.0
      %967 = vmatpush2.msra.mxu0 0.0
      %968 = vmatprep.subr.mxu0 0.0
      %969 = vmatpush2.msra.mxu0 0.0
      %970 = vmatprep.subr.mxu0 0.0
      %971 = vmatpush2.msra.mxu0 0.0
      %972 = vmatprep.subr.mxu0 0.0
      %973 = vmatpush2.msra.mxu0 0.0
      %974 = vmatprep.subr.mxu0 0.0
      %975 = vmatpush2.msra.mxu0 0.0
      %976 = vmatprep.subr.mxu0 0.0
      %977 = vmatpush2.msra.mxu0 0.0
      %978 = vmatprep.subr.mxu0 0.0
      %979 = vmatpush2.msra.mxu0 0.0
      %980 = vmatprep.subr.mxu0 0.0
      %981 = vmatpush2.msra.mxu0 0.0
      %982 = vmatprep.subr.mxu0 0.0
      %983 = vmatpush2.msra.mxu0 0.0
      %984 = vmatprep.subr.mxu0 0.0
      %985 = vmatpush2.msra.mxu0 0.0
      %986 = vmatprep.subr.mxu0 0.0
      %987 = vmatpush2.msra.mxu0 0.0
      %988 = vmatprep.subr.mxu0 0.0
      %989 = vmatpush2.msra.mxu0 0.0
      %990 = vmatprep.subr.mxu0 0.0
      %991 = vmatpush2.msra.mxu0 0.0
      %992 = vmatprep.subr.mxu0 0.0
      %993 = vmatpush2.msra.mxu0 0.0
      %994 = vmatprep.subr.mxu0 0.0
      %995 = vmatpush2.msra.mxu0 0.0
      %996 = vmatprep.mubr.f32.mxu0 0.0
      %997 = vmatmul.mubr.f32.gmra.mxu0 %v930
      %v998 = vpop.f32.mrf.mxu0
      %v999 = vadd.f32 0.0, %v998
      %v1000 = vpop.f32.mrf.mxu0
      %1001 = vdwg.mxu0
      %v1003 = vrot.slane %v999, 1
      %v1005 = vadd.f32 %v182, %v1003
      %v1006 = vxor.u32 %v1005, 2147483648
      %v1007 = vmul.f32 %v1006, 1.442695
      %v1008 = vpow.pop %v1007
      %v1009 = vadd.f32 %v1008, 1.0
      %v1010 = vrcp.pop %v1009
      %v1011 = vmul.f32 1.0, %v1010
      %v1012 = vtanh.pop %v1005
      %v1014 = vrot.slane %v919, 7
      %v1016 = vmul.f32 %v1011, %v1014
      %1018 = vrot.lane.b32.xlu0 %v1012, 64
      %v1019 = vpop.permute.xlu0 %1018
      %v1021 = vmul.f32 %v1011, %v1019
      %1023 = vrot.lane.b32.xlu0 %v1021, 32
      %v1024 = vpop.permute.xlu0 %1023
      %v1026 = vadd.f32 %v1016, %v1024
      %v1027 = vtanh.pop %v1026
      %1029 = vrot.lane.b32.xlu0 %v1027, 64
      %v1030 = vpop.permute.xlu0 %1029
      %v1032 = vmul.f32 %v1011, %v1030
      %v1034 = vrot.slane %v1032, 7
      %1035 = vrot.lane.b32.xlu0 %v1034, 32
      %v1036 = vpop.permute.xlu0 %1035
      %v1039 = vrot.slane %v1026, 7
      %1040 = vrot.lane.b32.xlu0 %v1039, 96
      %v1041 = vpop.permute.xlu0 %1040
    $region38: #{tpu_custom_call.1} parent=1 // loop_footer
      %s177 = sadd.s32 1, %s173
    $region39: #{tpu_custom_call.1} parent=1 // loop_footer_branch
      %172 = sbr.rel target = $region35
    $region40: #{tpu_custom_call.1} parent=1 // loop_exit
      _
    %vm1043 = vcmask 253952
    %1044 = vst.msk [vmem:[#allocation3] sm:$0x1] %vm1043, %v178
    %1045 = vst.msk [vmem:[#allocation4] sm:$0x1] %vm1043, %v179
    // Predicated region
    $region41: #{tpu_custom_call.1} parent=1 // pred_check
      %p1046 = pneg %p62
    $region42: #{tpu_custom_call.1} parent=1 // pred_check_branch
      %1048 = sbr.rel (%p1046) target = $region44
    $region43: #{tpu_custom_call.1} parent=1 // pred_region
      %v1049 = vld [vmem:[#allocation3] sm:$0x1]
      %1050 = vst.msk [vmem:[#allocation11] sm:$0x1] %vm1043, %v1049
      %v1051 = vld [vmem:[#allocation4] sm:$0x1]
      %1052 = vst.msk [vmem:[#allocation12] sm:$0x1] %vm1043, %v1051
    $region44: #{tpu_custom_call.1} parent=1 // pred_fallthru
      _
    // Predicated region
    $region45: #{tpu_custom_call.1} parent=1 // pred_check
      _
    $region46: #{tpu_custom_call.1} parent=1 // pred_check_branch
      %1054 = sbr.rel (0) target = $region48
    $region47: #{tpu_custom_call.1} parent=1 // pred_region
      %s1056 = ssub.s32 16, 16
      %1057 = vsyncadd [#allocation7], %s1056
      %s1059 = sshll.u32 [#allocation11], 4
      %s1060 = int_to_ptr.vmem [resolvable:$true] %s1059
      %1062 = dma.vmem_to_hbm [thread:$0]  %s1060, 16, %s4, [#allocation7]
    $region48: #{tpu_custom_call.1} parent=1 // pred_fallthru
      _
    // Predicated region
    $region49: #{tpu_custom_call.1} parent=1 // pred_check
      _
    $region50: #{tpu_custom_call.1} parent=1 // pred_check_branch
      %1064 = sbr.rel (0) target = $region52
    $region51: #{tpu_custom_call.1} parent=1 // pred_region
      %s1066 = ssub.s32 16, 16
      %1067 = vsyncadd [#allocation13], %s1066
      %s1069 = sshll.u32 [#allocation12], 4
      %s1070 = int_to_ptr.vmem [resolvable:$true] %s1069
      %1072 = dma.vmem_to_hbm [thread:$0]  %s1070, 16, %s5, [#allocation13]
    $region52: #{tpu_custom_call.1} parent=1 // pred_fallthru
      _
    // Predicated region
    $region53: #{tpu_custom_call.1} parent=1 // pred_check
      _
    $region54: #{tpu_custom_call.1} parent=1 // pred_check_branch
      %1074 = sbr.rel (0) target = $region56
    $region55: #{tpu_custom_call.1} parent=1 // pred_region
      %1075 = dma.done [#allocation7], 16
    $region56: #{tpu_custom_call.1} parent=1 // pred_fallthru
      _
    // Predicated region
    $region57: #{tpu_custom_call.1} parent=1 // pred_check
      _
    $region58: #{tpu_custom_call.1} parent=1 // pred_check_branch
      %1077 = sbr.rel (0) target = $region60
    $region59: #{tpu_custom_call.1} parent=1 // pred_region
      %1078 = dma.done [#allocation13], 16
    $region60: #{tpu_custom_call.1} parent=1 // pred_fallthru
      _
    %1079 = vsyncpa [#allocation6], 1
    %1080 = vsyncpa [#allocation9], 1
    %1081 = vsyncpa [#allocation7], 1
    %1082 = vsyncpa [#allocation13], 1

</llo_original>
